<compile_context>
chip_gen: v7x
topology: tpu7x:2x2x1
jax: 0.10.0
libtpu: 0.0.40
codegen_flags: <defaults>
</compile_context>

<pallas_src>
import functools
import math

import jax
import jax.numpy as jnp
from jax.experimental import pallas as pl
from jax.experimental.pallas import tpu as pltpu

_LN_EPS = 1e-5  # PyTorch nn.LayerNorm default


def _patch_merging_kernel(x_ref, ln_ref, w_ref, o_ref, *, c4: int, eps: float):
    """Fused 2x2 merge + LayerNorm(4C) + Linear(4C -> Npad, no bias).

    x_ref : (TR, 2, W2, 2C)  raw input patches; dim1 = h-parity,
            lane axis = [w-even channels (C) | w-odd channels (C)].
    ln_ref: (4, 2C) f32      rows = [gamma_even_h, gamma_odd_h, beta_even_h, beta_odd_h]
                             (already permuted to the kernel lane order).
    w_ref : (2, 2C, Npad)    reduction weight rows, permuted + zero-padded cols,
                             in the MXU compute dtype (bf16 by default).
    o_ref : (TR*W2, Npad)    output rows in (b, h2, w2) row-major order.
    """
    tr, _, w2, c2 = x_ref.shape
    tm = tr * w2

    x = x_ref[...]                                   # (TR, 2, W2, 2C)
    xa = x[:, 0].reshape(tm, c2).astype(jnp.float32)  # even-h rows  (TM, 2C)
    xb = x[:, 1].reshape(tm, c2).astype(jnp.float32)  # odd-h rows   (TM, 2C)

    ln = ln_ref[...]                                 # (4, 2C) f32
    ga, gb = ln[0:1, :], ln[1:2, :]
    ba, bb = ln[2:3, :], ln[3:4, :]

    inv_c4 = 1.0 / c4
    mean = (jnp.sum(xa, -1, keepdims=True) + jnp.sum(xb, -1, keepdims=True)) * inv_c4
    xac = xa - mean
    xbc = xb - mean
    var = (jnp.sum(xac * xac, -1, keepdims=True)
           + jnp.sum(xbc * xbc, -1, keepdims=True)) * inv_c4
    inv = jax.lax.rsqrt(var + eps)

    an = xac * inv * ga + ba                         # (TM, 2C) f32
    bn = xbc * inv * gb + bb

    w = w_ref[...]                                   # (2, 2C, Npad)
    acc = jnp.dot(an.astype(w.dtype), w[0], preferred_element_type=jnp.float32)
    acc = acc + jnp.dot(bn.astype(w.dtype), w[1], preferred_element_type=jnp.float32)
    o_ref[...] = acc.astype(o_ref.dtype)


def _round_up(x, m):
    return ((x + m - 1) // m) * m


def _pick_tr(R, W2, c4, n_pad, x_bytes, w_bytes,
             target_rows=1024, budget=36 * 1024 * 1024):
    """Pick # super-rows per tile: big tiles, >=2 grid steps, VMEM-safe,
    and tr*W2 a multiple of 8 (sublane alignment of the output block)."""
    f = 8 // math.gcd(W2, 8)                 # tr % f == 0  =>  tr*W2 % 8 == 0
    tr = max(1, target_rows // W2)
    if R >= 2:
        tr = min(tr, (R + 1) // 2)           # keep at least 2 grid steps (megacore)
    tr = max(f, (tr // f) * f)

    def tile_bytes(t):
        tm = t * W2
        return (2 * tm * c4 * x_bytes          # input block (double buffered)
                + 2 * tm * n_pad * x_bytes     # output block (double buffered)
                + 2 * c4 * n_pad * w_bytes     # resident weight (x2 safety)
                + 4 * 2 * (c4 // 2) * 4)       # LN params

    while tr > f and tile_bytes(tr) > budget:
        tr = max(f, ((tr // 2) // f) * f)
    if tr >= R:
        tr = R                               # single full block (exempt from 8-align)
    return tr


@functools.partial(jax.jit, static_argnames=("H", "W", "mxu_dtype"))
def patch_merging(x, gamma, beta, w_red, *, H, W, mxu_dtype=jnp.bfloat16):
    """x: (B, H*W, C) -> (B, H*W/4, 2C).  gamma/beta: (4C,), w_red: (4C, 2C)."""
    B, L, C = x.shape
    assert L == H * W, "input feature has wrong size"
    assert H % 2 == 0 and W % 2 == 0, f"x size ({H}*{W}) are not even."

    H2, W2 = H // 2, W // 2
    R = B * H2                      # super-rows
    M = R * W2                      # output rows
    C4, C2, N = 4 * C, 2 * C, 2 * C

    # Free reshape (no HBM copy): (B, H*W, C) -> (R, 2, W2, 2C)
    #   dim1 = h parity, lane axis = [w-even channels | w-odd channels].
    xv = x.reshape(R, 2, W2, C2)

    # One-time tiny rearrangement of LN / reduction params into the kernel's
    # lane order.  Concat order in torch is [x0, x1, x2, x3] =
    # [(h even,w even), (h odd,w even), (h even,w odd), (h odd,w odd)].
    gamma = gamma.astype(jnp.float32)
    beta = beta.astype(jnp.float32)
    g0, g1, g2, g3 = (gamma[i * C:(i + 1) * C] for i in range(4))
    b0, b1, b2, b3 = (beta[i * C:(i + 1) * C] for i in range(4))
    ln_params = jnp.stack([
        jnp.concatenate([g0, g2]),   # gamma, even-h lanes
        jnp.concatenate([g1, g3]),   # gamma, odd-h lanes
        jnp.concatenate([b0, b2]),   # beta,  even-h lanes
        jnp.concatenate([b1, b3]),   # beta,  odd-h lanes
    ])                               # (4, 2C) f32

    wc0, wc1, wc2, wc3 = (w_red[i * C:(i + 1) * C] for i in range(4))
    wa = jnp.concatenate([wc0, wc2], axis=0)      # (2C, N) pairs with even-h lanes
    wb = jnp.concatenate([wc1, wc3], axis=0)      # (2C, N) pairs with odd-h lanes

    # Lane-dense output: pad columns to a multiple of 128 with zeros.
    N_pad = _round_up(N, 128)
    if N_pad != N:
        pad = ((0, 0), (0, N_pad - N))
        wa = jnp.pad(wa, pad)
        wb = jnp.pad(wb, pad)
    w_hw = jnp.stack([wa, wb]).astype(mxu_dtype)  # (2, 2C, N_pad)

    # Tile selection (generation-safe: stays well inside v7x's 64 MiB VMEM).
    x_bytes = x.dtype.itemsize
    w_bytes = jnp.dtype(mxu_dtype).itemsize
    tr = _pick_tr(R, W2, C4, N_pad, x_bytes, w_bytes)
    TM = tr * W2
    grid = (pl.cdiv(R, tr),)

    cost = pl.CostEstimate(
        flops=2 * M * C4 * N_pad,
        transcendentals=M,
        bytes_accessed=(x.size * x_bytes + M * N_pad * x_bytes
                        + w_hw.size * w_bytes + ln_params.size * 4),
    )

    kernel = functools.partial(_patch_merging_kernel, c4=C4, eps=_LN_EPS)
    out2d = pl.pallas_call(
        kernel,
        out_shape=jax.ShapeDtypeStruct((M, N_pad), x.dtype),
        grid=grid,
        in_specs=[
            pl.BlockSpec((tr, 2, W2, C2), lambda i: (i, 0, 0, 0)),   # input rows
            pl.BlockSpec((4, C2), lambda i: (0, 0)),                 # LN params (resident)
            pl.BlockSpec((2, C2, N_pad), lambda i: (0, 0, 0)),       # weight (resident)
        ],
        out_specs=pl.BlockSpec((TM, N_pad), lambda i: (i, 0)),
        compiler_params=pltpu.CompilerParams(
            dimension_semantics=("parallel",),
            vmem_limit_bytes=48 * 1024 * 1024,
        ),
        cost_estimate=cost,
    )(xv, ln_params, w_hw)

    if N_pad != N:
        out2d = out2d[:, :N]        # drop zero-padded columns (small output copy)
    return out2d.reshape(B, H2 * W2, N)


def _reference(x, gamma, beta, w_red, H, W, mxu_dtype=None):
    """Pure-JAX reference mirroring the PyTorch forward.
    If mxu_dtype is given, the matmul operands are rounded to it (models the
    kernel's bf16 MXU path) with f32 accumulation."""
    B, L, C = x.shape
    xg = x.reshape(B, H, W, C)
    x0 = xg[:, 0::2, 0::2, :]
    x1 = xg[:, 1::2, 0::2, :]
    x2 = xg[:, 0::2, 1::2, :]
    x3 = xg[:, 1::2, 1::2, :]
    xcat = jnp.concatenate([x0, x1, x2, x3], -1).reshape(B, -1, 4 * C)
    xcat = xcat.astype(jnp.float32)
    mean = jnp.mean(xcat, axis=-1, keepdims=True)
    var = jnp.mean((xcat - mean) ** 2, axis=-1, keepdims=True)
    xn = (xcat - mean) * jax.lax.rsqrt(var + _LN_EPS) * gamma.astype(jnp.float32) \
         + beta.astype(jnp.float32)
    w = w_red
    if mxu_dtype is not None:
        xn = xn.astype(mxu_dtype)
        w = w.astype(mxu_dtype)
    out = jnp.einsum("blk,kn->bln", xn, w, preferred_element_type=jnp.float32)
    return out.astype(x.dtype)


if __name__ == "__main__":
    # Small shapes consistent with the module: B=2, H=W=16, dim=C=32
    B, H, W, C = 2, 16, 16, 32
    key = jax.random.PRNGKey(0)
    kx, kw, kg, kb = jax.random.split(key, 4)

    x = jax.random.normal(kx, (B, H * W, C), dtype=jnp.float32)

    C4, C2 = 4 * C, 2 * C
    gamma = 1.0 + 0.01 * jax.random.normal(kg, (C4,), dtype=jnp.float32)
    beta = 0.01 * jax.random.normal(kb, (C4,), dtype=jnp.float32)
    w_torch = jax.random.normal(kw, (C2, C4), dtype=jnp.float32) * (1.0 / jnp.sqrt(C4))
    w_red = w_torch.T  # (4C, 2C) == torch Linear.weight.T

    out = patch_merging(x, gamma, beta, w_red, H=H, W=W)
    out = jax.block_until_ready(out)
    assert out.shape == (B, (H // 2) * (W // 2), C2), out.shape

    # Primary check: same math (bf16 MXU operands, f32 LN/accum) -> tight tol.
    ref_matched = _reference(x, gamma, beta, w_red, H, W, mxu_dtype=jnp.bfloat16)
    err_m = float(jnp.max(jnp.abs(out - ref_matched)))
    assert jnp.allclose(out, ref_matched, atol=5e-3, rtol=5e-3), err_m

    # Sanity check vs full-f32 module math (tolerance covers bf16 matmul rounding).
    ref_f32 = _reference(x, gamma, beta, w_red, H, W, mxu_dtype=None)
    err_f = float(jnp.max(jnp.abs(out - ref_f32)))
    assert jnp.allclose(out, ref_f32, atol=1e-1, rtol=1e-1), err_f

    print("KERNEL_OK")
</pallas_src>

<mosaic_0001>
module attributes {stable_mosaic.version = 11 : i64} {
  func.func @_patch_merging_kernel(%arg0: i32, %arg1: memref<8x2x8x64xf32, #tpu.memory_space<vmem>>, %arg2: memref<4x64xf32, #tpu.memory_space<vmem>>, %arg3: memref<2x64x128xbf16, #tpu.memory_space<vmem>>, %arg4: memref<64x128xf32, #tpu.memory_space<vmem>>) attributes {dimension_semantics = [#tpu.dimension_semantics<parallel>], iteration_bounds = array<i64: 2>, scalar_prefetch = 0 : i64, scratch_operands = 0 : i64, tpu.core_type = #tpu.core_type<tc>, window_params = [{transform_indices = @transform_0, window_bounds = array<i64: 8, 2, 8, 64>}, {pipeline_mode = #tpu.pipeline_mode<synchronous>, transform_indices = @transform_1, window_bounds = array<i64: 4, 64>}, {pipeline_mode = #tpu.pipeline_mode<synchronous>, transform_indices = @transform_2, window_bounds = array<i64: 2, 64, 128>}, {transform_indices = @transform_3, window_bounds = array<i64: 64, 128>}]} {
    %c0 = arith.constant 0 : index
    %c0_0 = arith.constant 0 : index
    %c0_1 = arith.constant 0 : index
    %c0_2 = arith.constant 0 : index
    %0 = vector.load %arg1[%c0, %c0_0, %c0_1, %c0_2] : memref<8x2x8x64xf32, #tpu.memory_space<vmem>>, vector<8x2x8x64xf32>
    %1 = vector.extract_strided_slice %0 {offsets = [0, 0, 0, 0], sizes = [8, 1, 8, 64], strides = [1, 1, 1, 1]} : vector<8x2x8x64xf32> to vector<8x1x8x64xf32>
    %2 = vector.shape_cast %1 : vector<8x1x8x64xf32> to vector<8x8x64xf32>
    %3 = vector.shape_cast %2 : vector<8x8x64xf32> to vector<64x64xf32>
    %4 = vector.extract_strided_slice %0 {offsets = [0, 1, 0, 0], sizes = [8, 1, 8, 64], strides = [1, 1, 1, 1]} : vector<8x2x8x64xf32> to vector<8x1x8x64xf32>
    %5 = vector.shape_cast %4 : vector<8x1x8x64xf32> to vector<8x8x64xf32>
    %6 = vector.shape_cast %5 : vector<8x8x64xf32> to vector<64x64xf32>
    %c0_3 = arith.constant 0 : index
    %c0_4 = arith.constant 0 : index
    %7 = vector.load %arg2[%c0_3, %c0_4] : memref<4x64xf32, #tpu.memory_space<vmem>>, vector<4x64xf32>
    %8 = vector.extract_strided_slice %7 {offsets = [0, 0], sizes = [1, 64], strides = [1, 1]} : vector<4x64xf32> to vector<1x64xf32>
    %9 = vector.extract_strided_slice %7 {offsets = [1, 0], sizes = [1, 64], strides = [1, 1]} : vector<4x64xf32> to vector<1x64xf32>
    %10 = vector.extract_strided_slice %7 {offsets = [2, 0], sizes = [1, 64], strides = [1, 1]} : vector<4x64xf32> to vector<1x64xf32>
    %11 = vector.extract_strided_slice %7 {offsets = [3, 0], sizes = [1, 64], strides = [1, 1]} : vector<4x64xf32> to vector<1x64xf32>
    %cst = arith.constant dense<0.000000e+00> : vector<64xf32>
    %12 = vector.multi_reduction <add>, %3, %cst [1] : vector<64x64xf32> to vector<64xf32>
    %13 = vector.shape_cast %12 : vector<64xf32> to vector<64x1xf32>
    %cst_5 = arith.constant dense<0.000000e+00> : vector<64xf32>
    %14 = vector.multi_reduction <add>, %6, %cst_5 [1] : vector<64x64xf32> to vector<64xf32>
    %15 = vector.shape_cast %14 : vector<64xf32> to vector<64x1xf32>
    %16 = arith.addf %13, %15 : vector<64x1xf32>
    %cst_6 = arith.constant 7.812500e-03 : f32
    %17 = vector.broadcast %cst_6 : f32 to vector<64x1xf32>
    %18 = arith.mulf %16, %17 : vector<64x1xf32>
    %19 = vector.broadcast %18 : vector<64x1xf32> to vector<64x64xf32>
    %20 = arith.subf %3, %19 : vector<64x64xf32>
    %21 = vector.broadcast %18 : vector<64x1xf32> to vector<64x64xf32>
    %22 = arith.subf %6, %21 : vector<64x64xf32>
    %23 = arith.mulf %20, %20 : vector<64x64xf32>
    %cst_7 = arith.constant dense<0.000000e+00> : vector<64xf32>
    %24 = vector.multi_reduction <add>, %23, %cst_7 [1] : vector<64x64xf32> to vector<64xf32>
    %25 = vector.shape_cast %24 : vector<64xf32> to vector<64x1xf32>
    %26 = arith.mulf %22, %22 : vector<64x64xf32>
    %cst_8 = arith.constant dense<0.000000e+00> : vector<64xf32>
    %27 = vector.multi_reduction <add>, %26, %cst_8 [1] : vector<64x64xf32> to vector<64xf32>
    %28 = vector.shape_cast %27 : vector<64xf32> to vector<64x1xf32>
    %29 = arith.addf %25, %28 : vector<64x1xf32>
    %cst_9 = arith.constant 7.812500e-03 : f32
    %30 = vector.broadcast %cst_9 : f32 to vector<64x1xf32>
    %31 = arith.mulf %29, %30 : vector<64x1xf32>
    %cst_10 = arith.constant 9.99999974E-6 : f32
    %32 = vector.broadcast %cst_10 : f32 to vector<64x1xf32>
    %33 = arith.addf %31, %32 : vector<64x1xf32>
    %34 = math.rsqrt %33 : vector<64x1xf32>
    %35 = vector.broadcast %34 : vector<64x1xf32> to vector<64x64xf32>
    %36 = arith.mulf %20, %35 : vector<64x64xf32>
    %37 = vector.broadcast %8 : vector<1x64xf32> to vector<64x64xf32>
    %38 = arith.mulf %36, %37 : vector<64x64xf32>
    %39 = vector.broadcast %10 : vector<1x64xf32> to vector<64x64xf32>
    %40 = arith.addf %38, %39 : vector<64x64xf32>
    %41 = vector.broadcast %34 : vector<64x1xf32> to vector<64x64xf32>
    %42 = arith.mulf %22, %41 : vector<64x64xf32>
    %43 = vector.broadcast %9 : vector<1x64xf32> to vector<64x64xf32>
    %44 = arith.mulf %42, %43 : vector<64x64xf32>
    %45 = vector.broadcast %11 : vector<1x64xf32> to vector<64x64xf32>
    %46 = arith.addf %44, %45 : vector<64x64xf32>
    %c0_11 = arith.constant 0 : index
    %c0_12 = arith.constant 0 : index
    %c0_13 = arith.constant 0 : index
    %47 = vector.load %arg3[%c0_11, %c0_12, %c0_13] : memref<2x64x128xbf16, #tpu.memory_space<vmem>>, vector<2x64x128xbf16>
    %48 = arith.truncf %40 : vector<64x64xf32> to vector<64x64xbf16>
    %49 = vector.extract_strided_slice %47 {offsets = [0, 0, 0], sizes = [1, 64, 128], strides = [1, 1, 1]} : vector<2x64x128xbf16> to vector<1x64x128xbf16>
    %50 = vector.shape_cast %49 : vector<1x64x128xbf16> to vector<64x128xbf16>
    %cst_14 = arith.constant dense<0.000000e+00> : vector<64x128xf32>
    %51 = tpu.matmul %48, %50, %cst_14 {dimension_numbers = #tpu.dot_dimension_numbers<[1], [0], [0], [1], [0, 0, 1, 1], [], []>} : vector<64x64xbf16>, vector<64x128xbf16>, vector<64x128xf32> -> vector<64x128xf32>
    %52 = arith.truncf %46 : vector<64x64xf32> to vector<64x64xbf16>
    %53 = vector.extract_strided_slice %47 {offsets = [1, 0, 0], sizes = [1, 64, 128], strides = [1, 1, 1]} : vector<2x64x128xbf16> to vector<1x64x128xbf16>
    %54 = vector.shape_cast %53 : vector<1x64x128xbf16> to vector<64x128xbf16>
    %cst_15 = arith.constant dense<0.000000e+00> : vector<64x128xf32>
    %55 = tpu.matmul %52, %54, %cst_15 {dimension_numbers = #tpu.dot_dimension_numbers<[1], [0], [0], [1], [0, 0, 1, 1], [], []>} : vector<64x64xbf16>, vector<64x128xbf16>, vector<64x128xf32> -> vector<64x128xf32>
    %56 = arith.addf %51, %55 : vector<64x128xf32>
    %c0_16 = arith.constant 0 : index
    %c0_17 = arith.constant 0 : index
    %57 = vector.load %arg4[%c0_16, %c0_17] : memref<64x128xf32, #tpu.memory_space<vmem>>, vector<64x128xf32>
    tpu.vector_store %arg4[%c0_16, %c0_17], %56 {strides = array<i32>} : memref<64x128xf32, #tpu.memory_space<vmem>>, vector<64x128xf32>,
    return
  }
  func.func @transform_0(%arg0: i32) -> (i32, i32, i32, i32) {
    %c0_i32 = arith.constant 0 : i32
    %c0_i32_0 = arith.constant 0 : i32
    %c0_i32_1 = arith.constant 0 : i32
    %c0_i32_2 = arith.constant 0 : i32
    return %arg0, %c0_i32, %c0_i32_0, %c0_i32_1 : i32, i32, i32, i32
  }
  func.func @transform_1(%arg0: i32) -> (i32, i32) {
    %c0_i32 = arith.constant 0 : i32
    %c0_i32_0 = arith.constant 0 : i32
    %c0_i32_1 = arith.constant 0 : i32
    return %c0_i32, %c0_i32_0 : i32, i32
  }
  func.func @transform_2(%arg0: i32) -> (i32, i32, i32) {
    %c0_i32 = arith.constant 0 : i32
    %c0_i32_0 = arith.constant 0 : i32
    %c0_i32_1 = arith.constant 0 : i32
    %c0_i32_2 = arith.constant 0 : i32
    return %c0_i32, %c0_i32_0, %c0_i32_1 : i32, i32, i32
  }
  func.func @transform_3(%arg0: i32) -> (i32, i32) {
    %c0_i32 = arith.constant 0 : i32
    %c0_i32_0 = arith.constant 0 : i32
    return %arg0, %c0_i32 : i32, i32
  }
}

</mosaic_0001>

<llo_original>
// kernel: patch_merging.1
$region0: #{patch_merging.1}
  #allocation0 [shape = 'u32[]', space=smem, size = 0x4, offset = 0x4, fixed_abs, tag = 'smem constant byte address 0x4 - core index']
  #allocation1 [shape = 'u32[144,128]{1,0:T(1,128)}', space=vmem, size = 0x12000, scoped, tag = 'internal scratch']
  %s0 = inlined_call_operand.vmem [shape: f32[16,2,8,64], index: 0, kind: input, shape index: {}]
  %s1 = inlined_call_operand.vmem [shape: f32[4,64], index: 1, kind: input, shape index: {}]
  %s2 = inlined_call_operand.vmem [shape: bf16[2,64,128], index: 2, kind: input, shape index: {}]
  %s3 = inlined_call_operand.hbm [shape: f32[128,128], index: 3, kind: output, shape index: {}]
  %s4 = sld [smem:[#allocation0]]
  $region45: #{patch_merging.1} parent=0
    _
  %s6 = ssub.s32 1, %s4
  %s7 = scalar_select 0, %s6, %s4
  $region1: #{patch_merging.1} parent=0
    #allocation2 [shape = 'u8[65536]{0}', space=vmem, size = 0x10000, scoped, tag = 'output window, operand 0']
    #allocation3 [shape = 's32[2]{0}', space=sflag, size = 0x8, scoped, tag = 'scoped memory for patch_merging.1']
    %8 = vsyncpa [#allocation3], 0
    %s9 = scalar_lea.sflag [#allocation3], 1
    %10 = vsyncpa %s9, 0
    loop: start=0, step=1, limit=4
    $region2: #{patch_merging.1} parent=1 // loop_pre_header
      _
    $region3: #{patch_merging.1} parent=1 // loop_header
      %s12 = sphi 0, %s16
      %p13 = scmp.ge.s32.totalorder %s12, 4
      %s22 = sphi 0, %s24
      %s25 = sphi 0, %s22
      %s26 = sphi 0, %s25
      %s42 = sphi 0, %s26
      %s46 = sphi 0, %s46
      %s48 = sphi 0, %s46
      %s49 = sphi 0, %s48
      %s63 = sphi 0, %s49
      %s67 = sphi 0, %s67
      %s69 = sphi 0, %s67
      %s70 = sphi 0, %s69
      %s84 = sphi 0, %s70
      %s90 = sphi 0, %s92
      %s93 = sphi 0, %s90
      %s94 = sphi 0, %s93
      %s110 = sphi 0, %s94
    $region4: #{patch_merging.1} parent=1 // loop_header_branch
      %15 = sbr.rel (%p13) target = $region8
    $region5: #{patch_merging.1} parent=1 // loop_body
      %s17 = ssub.s32 %s12, 1
      %s18 = ssub.s32 %s12, 2
      %s19 = sadd.s32 %s12, 1
      %s20 = ssub.s32 %s12, %s19
      %p21 = scmp.eq.s32.totalorder %s20, 0
      %s23 = sadd.s32 %s22, 1
      %s24 = scalar_select %p21, %s22, %s23
      %p27 = pneg %p21
      %p28 = scmp.eq.s32.totalorder %s12, 1
      %p29 = por %p27, %p28
      %p30 = scmp.ne.s32.totalorder %s22, %s25
      %p31 = scmp.eq.s32.totalorder %s12, 0
      %p32 = por %p30, %p31
      %p33 = scmp.ne.s32.totalorder %s22, %s25
      %p34 = scmp.eq.s32.totalorder %s17, 1
      %p35 = por %p33, %p34
      %p36 = scmp.ne.s32.totalorder %s25, %s26
      %p37 = scmp.eq.s32.totalorder %s17, 0
      %p38 = por %p36, %p37
      %p39 = scmp.ne.s32.totalorder %s25, %s26
      %p40 = scmp.eq.s32.totalorder %s18, 1
      %p41 = por %p39, %p40
      %p43 = scmp.ne.s32.totalorder %s26, %s42
      %p44 = scmp.eq.s32.totalorder %s18, 0
      %p45 = por %p43, %p44
      %s47 = sadd.s32 %s46, 1
      %p50 = scmp.eq.s32.totalorder %s12, 1
      %p51 = scmp.ne.s32.totalorder %s46, %s48
      %p52 = scmp.eq.s32.totalorder %s12, 0
      %p53 = por %p51, %p52
      %p54 = scmp.ne.s32.totalorder %s46, %s48
      %p55 = scmp.eq.s32.totalorder %s17, 1
      %p56 = por %p54, %p55
      %p57 = scmp.ne.s32.totalorder %s48, %s49
      %p58 = scmp.eq.s32.totalorder %s17, 0
      %p59 = por %p57, %p58
      %p60 = scmp.ne.s32.totalorder %s48, %s49
      %p61 = scmp.eq.s32.totalorder %s18, 1
      %p62 = por %p60, %p61
      %p64 = scmp.ne.s32.totalorder %s49, %s63
      %p65 = scmp.eq.s32.totalorder %s18, 0
      %p66 = por %p64, %p65
      %s68 = sadd.s32 %s67, 1
      %p71 = scmp.eq.s32.totalorder %s12, 1
      %p72 = scmp.ne.s32.totalorder %s67, %s69
      %p73 = scmp.eq.s32.totalorder %s12, 0
      %p74 = por %p72, %p73
      %p75 = scmp.ne.s32.totalorder %s67, %s69
      %p76 = scmp.eq.s32.totalorder %s17, 1
      %p77 = por %p75, %p76
      %p78 = scmp.ne.s32.totalorder %s69, %s70
      %p79 = scmp.eq.s32.totalorder %s17, 0
      %p80 = por %p78, %p79
      %p81 = scmp.ne.s32.totalorder %s69, %s70
      %p82 = scmp.eq.s32.totalorder %s18, 1
      %p83 = por %p81, %p82
      %p85 = scmp.ne.s32.totalorder %s70, %s84
      %p86 = scmp.eq.s32.totalorder %s18, 0
      %p87 = por %p85, %p86
      %s88 = ssub.s32 %s12, %s19
      %p89 = scmp.eq.s32.totalorder %s88, 0
      %s91 = sadd.s32 %s90, 1
      %s92 = scalar_select %p89, %s90, %s91
      %p95 = pneg %p89
      %p96 = scmp.eq.s32.totalorder %s12, 1
      %p97 = por %p95, %p96
      %p98 = scmp.ne.s32.totalorder %s90, %s93
      %p99 = scmp.eq.s32.totalorder %s12, 0
      %p100 = por %p98, %p99
      %p101 = scmp.ne.s32.totalorder %s90, %s93
      %p102 = scmp.eq.s32.totalorder %s17, 1
      %p103 = por %p101, %p102
      %p104 = scmp.ne.s32.totalorder %s93, %s94
      %p105 = scmp.eq.s32.totalorder %s17, 0
      %p106 = por %p104, %p105
      %p107 = scmp.ne.s32.totalorder %s93, %s94
      %p108 = scmp.eq.s32.totalorder %s18, 1
      %p109 = por %p107, %p108
      %p111 = scmp.ne.s32.totalorder %s94, %s110
      %p112 = scmp.eq.s32.totalorder %s18, 0
      %p113 = por %p111, %p112
      %p114 = scmp.le.s32.totalorder 1, %s12
      %p115 = scmp.lt.s32.totalorder %s12, 3
      %p116 = pnand %p114, %p115
      %p117 = pneg %p116
      // Predicated region
      $region9: #{patch_merging.1} parent=5 // pred_check
        _
      $region10: #{patch_merging.1} parent=5 // pred_check_branch
        %119 = sbr.rel (%p116) target = $region12
      $region11: #{patch_merging.1} parent=5 // pred_region
        %s120 = ssub.s32 %s12, 1
        // Predicated region
        $region13: #{patch_merging.1} parent=11 // pred_check
          %p121 = pneg %p59
        $region14: #{patch_merging.1} parent=11 // pred_check_branch
          %123 = sbr.rel (%p121) target = $region16
        $region15: #{patch_merging.1} parent=11 // pred_region
          _
        $region16: #{patch_merging.1} parent=11 // pred_fallthru
          _
        // Predicated region
        $region17: #{patch_merging.1} parent=11 // pred_check
          %p124 = pneg %p80
        $region18: #{patch_merging.1} parent=11 // pred_check_branch
          %126 = sbr.rel (%p124) target = $region20
        $region19: #{patch_merging.1} parent=11 // pred_region
          _
        $region20: #{patch_merging.1} parent=11 // pred_fallthru
          _
      $region12: #{patch_merging.1} parent=5 // pred_fallthru
        _
      %p127 = scmp.lt.s32.totalorder %s12, 2
      // Predicated region
      $region21: #{patch_merging.1} parent=5 // pred_check
        %p128 = pneg %p127
      $region22: #{patch_merging.1} parent=5 // pred_check_branch
        %130 = sbr.rel (%p128) target = $region24
      $region23: #{patch_merging.1} parent=5 // pred_region
        // Predicated region
        $region25: #{patch_merging.1} parent=23 // pred_check
          %p131 = pneg %p32
        $region26: #{patch_merging.1} parent=23 // pred_check_branch
          %133 = sbr.rel (%p131) target = $region28
        $region27: #{patch_merging.1} parent=23 // pred_region
          %s134 = smul.u32 8, %s12
          %p135 = scmp.lt.s32.totalorder %s134, 15
          %s136 = scalar_select %p135, %s134, 15
          %s137 = smul.addr %s136, 2
          %s138 = smul.addr %s137, 8
          %s139 = scalar_lea.vmem %s0, %s138
          %s140 = smul.u32 8, %s12
        $region28: #{patch_merging.1} parent=23 // pred_fallthru
          _
      $region24: #{patch_merging.1} parent=5 // pred_fallthru
        _
      %p141 = scmp.le.s32.totalorder 1, %s12
      %p142 = scmp.lt.s32.totalorder %s12, 3
      %p143 = pnand %p141, %p142
      %p144 = pneg %p143
      // Predicated region
      $region29: #{patch_merging.1} parent=5 // pred_check
        _
      $region30: #{patch_merging.1} parent=5 // pred_check_branch
        %146 = sbr.rel (%p143) target = $region32
      $region31: #{patch_merging.1} parent=5 // pred_region
        %s147 = ssub.s32 %s12, 1
        %s148 = smul.u32 8, %s17
        %p149 = scmp.lt.s32.totalorder %s148, 15
        %s150 = scalar_select %p149, %s148, 15
        %s151 = smul.addr %s150, 2
        %s152 = smul.addr %s151, 8
        %s153 = scalar_lea.vmem %s0, %s152
        %p154 = pneg %p38
        %p155 = pneg %p35
        %p156 = pneg %p59
        %p157 = pneg %p56
        %p158 = pneg %p80
        %p159 = pneg %p77
        %p160 = pneg %p106
        %p161 = pneg %p103
        %s162 = sand.u32 %s93, 1
        %s163 = scalar_lea.sflag [#allocation3], %s162
        %s164 = sand.u32 %s93, 1
        %s165 = smul.addr %s164, 64
        %s166 = scalar_lea.vmem [#allocation2], %s165
        %s167 = smul.u32 8, %s17
        %p168 = scmp.lt.s32.totalorder %s167, 15
        %s169 = scalar_select %p168, %s167, 15
        %s170 = smul.addr %s169, 2
        %s171 = smul.addr %s170, 8
        %s172 = scalar_lea.vmem %s0, %s171
        %s173 = smul.u32 8, %s17
        %s174 = smul.u32 8, %s17
        %v176 = vld [vmem:[%s172] sm:$0xff]
        %v177 = vld [vmem:[%s172 + $0x8] sm:$0xff]
        %v178 = vld [vmem:[%s172 + $0x10] sm:$0xff]
        %v179 = vld [vmem:[%s172 + $0x18] sm:$0xff]
        %v180 = vld [vmem:[%s172 + $0x20] sm:$0xff]
        %v181 = vld [vmem:[%s172 + $0x28] sm:$0xff]
        %v182 = vld [vmem:[%s172 + $0x30] sm:$0xff]
        %v183 = vld [vmem:[%s172 + $0x38] sm:$0xff]
        %v184 = vld [vmem:[%s172 + $0x40] sm:$0xff]
        %v185 = vld [vmem:[%s172 + $0x48] sm:$0xff]
        %v186 = vld [vmem:[%s172 + $0x50] sm:$0xff]
        %v187 = vld [vmem:[%s172 + $0x58] sm:$0xff]
        %v188 = vld [vmem:[%s172 + $0x60] sm:$0xff]
        %v189 = vld [vmem:[%s172 + $0x68] sm:$0xff]
        %v190 = vld [vmem:[%s172 + $0x70] sm:$0xff]
        %v191 = vld [vmem:[%s172 + $0x78] sm:$0xff]
        %v192 = vld [vmem:[%s1] sm:$0xf]
        %vm193 = vcmask 523264
        %v194 = vsel %vm193, %v176, 0.0
        %195 = vadd.xlane.f32.xlu0 %v194
        %v196 = vpop.xlane.xlu0 %195
        %v197 = vsel %vm193, %v178, 0.0
        %198 = vadd.xlane.f32.xlu0 %v197
        %v199 = vpop.xlane.xlu0 %198
        %v200 = vsel %vm193, %v180, 0.0
        %201 = vadd.xlane.f32.xlu0 %v200
        %v202 = vpop.xlane.xlu0 %201
        %v203 = vsel %vm193, %v182, 0.0
        %204 = vadd.xlane.f32.xlu0 %v203
        %v205 = vpop.xlane.xlu0 %204
        %v206 = vsel %vm193, %v184, 0.0
        %207 = vadd.xlane.f32.xlu0 %v206
        %v208 = vpop.xlane.xlu0 %207
        %v209 = vsel %vm193, %v186, 0.0
        %210 = vadd.xlane.f32.xlu0 %v209
        %v211 = vpop.xlane.xlu0 %210
        %v212 = vsel %vm193, %v188, 0.0
        %213 = vadd.xlane.f32.xlu0 %v212
        %v214 = vpop.xlane.xlu0 %213
        %v215 = vsel %vm193, %v190, 0.0
        %216 = vadd.xlane.f32.xlu0 %v215
        %v217 = vpop.xlane.xlu0 %216
        %v218 = vsel %vm193, %v177, 0.0
        %219 = vadd.xlane.f32.xlu0 %v218
        %v220 = vpop.xlane.xlu0 %219
        %v221 = vsel %vm193, %v179, 0.0
        %222 = vadd.xlane.f32.xlu0 %v221
        %v223 = vpop.xlane.xlu0 %222
        %v224 = vsel %vm193, %v181, 0.0
        %225 = vadd.xlane.f32.xlu0 %v224
        %v226 = vpop.xlane.xlu0 %225
        %v227 = vsel %vm193, %v183, 0.0
        %228 = vadd.xlane.f32.xlu0 %v227
        %v229 = vpop.xlane.xlu0 %228
        %v230 = vsel %vm193, %v185, 0.0
        %231 = vadd.xlane.f32.xlu0 %v230
        %v232 = vpop.xlane.xlu0 %231
        %v233 = vsel %vm193, %v187, 0.0
        %234 = vadd.xlane.f32.xlu0 %v233
        %v235 = vpop.xlane.xlu0 %234
        %v236 = vsel %vm193, %v189, 0.0
        %237 = vadd.xlane.f32.xlu0 %v236
        %v238 = vpop.xlane.xlu0 %237
        %v239 = vsel %vm193, %v191, 0.0
        %240 = vadd.xlane.f32.xlu0 %v239
        %v241 = vpop.xlane.xlu0 %240
        %v242 = vadd.f32 %v196, %v220
        %v243 = vadd.f32 %v199, %v223
        %v244 = vadd.f32 %v202, %v226
        %v245 = vadd.f32 %v205, %v229
        %v246 = vadd.f32 %v208, %v232
        %v247 = vadd.f32 %v211, %v235
        %v248 = vadd.f32 %v214, %v238
        %v249 = vadd.f32 %v217, %v241
        %v250 = vmul.f32 %v242, 0.0078125
        %v251 = vmul.f32 %v243, 0.0078125
        %v252 = vmul.f32 %v244, 0.0078125
        %v253 = vmul.f32 %v245, 0.0078125
        %v254 = vmul.f32 %v246, 0.0078125
        %v255 = vmul.f32 %v247, 0.0078125
        %v256 = vmul.f32 %v248, 0.0078125
        %v257 = vmul.f32 %v249, 0.0078125
        %v258 = vsub.f32 %v176, %v250
        %v259 = vsub.f32 %v178, %v251
        %v260 = vsub.f32 %v180, %v252
        %v261 = vsub.f32 %v182, %v253
        %v262 = vsub.f32 %v184, %v254
        %v263 = vsub.f32 %v186, %v255
        %v264 = vsub.f32 %v188, %v256
        %v265 = vsub.f32 %v190, %v257
        %v266 = vsub.f32 %v177, %v250
        %v267 = vsub.f32 %v179, %v251
        %v268 = vsub.f32 %v181, %v252
        %v269 = vsub.f32 %v183, %v253
        %v270 = vsub.f32 %v185, %v254
        %v271 = vsub.f32 %v187, %v255
        %v272 = vsub.f32 %v189, %v256
        %v273 = vsub.f32 %v191, %v257
        %v274 = vmul.f32 %v258, %v258
        %v275 = vmul.f32 %v259, %v259
        %v276 = vmul.f32 %v260, %v260
        %v277 = vmul.f32 %v261, %v261
        %v278 = vmul.f32 %v262, %v262
        %v279 = vmul.f32 %v263, %v263
        %v280 = vmul.f32 %v264, %v264
        %v281 = vmul.f32 %v265, %v265
        %v282 = vsel %vm193, %v274, 0.0
        %283 = vadd.xlane.f32.xlu0 %v282
        %v284 = vpop.xlane.xlu0 %283
        %v285 = vsel %vm193, %v275, 0.0
        %286 = vadd.xlane.f32.xlu0 %v285
        %v287 = vpop.xlane.xlu0 %286
        %v288 = vsel %vm193, %v276, 0.0
        %289 = vadd.xlane.f32.xlu0 %v288
        %v290 = vpop.xlane.xlu0 %289
        %v291 = vsel %vm193, %v277, 0.0
        %292 = vadd.xlane.f32.xlu0 %v291
        %v293 = vpop.xlane.xlu0 %292
        %v294 = vsel %vm193, %v278, 0.0
        %295 = vadd.xlane.f32.xlu0 %v294
        %v296 = vpop.xlane.xlu0 %295
        %v297 = vsel %vm193, %v279, 0.0
        %298 = vadd.xlane.f32.xlu0 %v297
        %v299 = vpop.xlane.xlu0 %298
        %v300 = vsel %vm193, %v280, 0.0
        %301 = vadd.xlane.f32.xlu0 %v300
        %v302 = vpop.xlane.xlu0 %301
        %v303 = vsel %vm193, %v281, 0.0
        %304 = vadd.xlane.f32.xlu0 %v303
        %v305 = vpop.xlane.xlu0 %304
        %v306 = vmul.f32 %v266, %v266
        %v307 = vmul.f32 %v267, %v267
        %v308 = vmul.f32 %v268, %v268
        %v309 = vmul.f32 %v269, %v269
        %v310 = vmul.f32 %v270, %v270
        %v311 = vmul.f32 %v271, %v271
        %v312 = vmul.f32 %v272, %v272
        %v313 = vmul.f32 %v273, %v273
        %v314 = vsel %vm193, %v306, 0.0
        %315 = vadd.xlane.f32.xlu0 %v314
        %v316 = vpop.xlane.xlu0 %315
        %v317 = vsel %vm193, %v307, 0.0
        %318 = vadd.xlane.f32.xlu0 %v317
        %v319 = vpop.xlane.xlu0 %318
        %v320 = vsel %vm193, %v308, 0.0
        %321 = vadd.xlane.f32.xlu0 %v320
        %v322 = vpop.xlane.xlu0 %321
        %v323 = vsel %vm193, %v309, 0.0
        %324 = vadd.xlane.f32.xlu0 %v323
        %v325 = vpop.xlane.xlu0 %324
        %v326 = vsel %vm193, %v310, 0.0
        %327 = vadd.xlane.f32.xlu0 %v326
        %v328 = vpop.xlane.xlu0 %327
        %v329 = vsel %vm193, %v311, 0.0
        %330 = vadd.xlane.f32.xlu0 %v329
        %v331 = vpop.xlane.xlu0 %330
        %v332 = vsel %vm193, %v312, 0.0
        %333 = vadd.xlane.f32.xlu0 %v332
        %v334 = vpop.xlane.xlu0 %333
        %v335 = vsel %vm193, %v313, 0.0
        %336 = vadd.xlane.f32.xlu0 %v335
        %v337 = vpop.xlane.xlu0 %336
        %v338 = vadd.f32 %v284, %v316
        %v339 = vadd.f32 %v287, %v319
        %v340 = vadd.f32 %v290, %v322
        %v341 = vadd.f32 %v293, %v325
        %v342 = vadd.f32 %v296, %v328
        %v343 = vadd.f32 %v299, %v331
        %v344 = vadd.f32 %v302, %v334
        %v345 = vadd.f32 %v305, %v337
        %v346 = vmul.f32 %v338, 0.0078125
        %v347 = vmul.f32 %v339, 0.0078125
        %v348 = vmul.f32 %v340, 0.0078125
        %v349 = vmul.f32 %v341, 0.0078125
        %v350 = vmul.f32 %v342, 0.0078125
        %v351 = vmul.f32 %v343, 0.0078125
        %v352 = vmul.f32 %v344, 0.0078125
        %v353 = vmul.f32 %v345, 0.0078125
        %v354 = vadd.f32 %v346, 1e-05
        %v355 = vadd.f32 %v347, 1e-05
        %v356 = vadd.f32 %v348, 1e-05
        %v357 = vadd.f32 %v349, 1e-05
        %v358 = vadd.f32 %v350, 1e-05
        %v359 = vadd.f32 %v351, 1e-05
        %v360 = vadd.f32 %v352, 1e-05
        %v361 = vadd.f32 %v353, 1e-05
        %v362 = vrsqrt.pop %v354
        %v363 = vrsqrt.pop %v355
        %v364 = vrsqrt.pop %v356
        %v365 = vrsqrt.pop %v357
        %v366 = vrsqrt.pop %v358
        %v367 = vrsqrt.pop %v359
        %v368 = vrsqrt.pop %v360
        %v369 = vrsqrt.pop %v361
        %v370 = vmul.f32 %v258, %v362
        %v371 = vmul.f32 %v259, %v363
        %v372 = vmul.f32 %v260, %v364
        %v373 = vmul.f32 %v261, %v365
        %v374 = vmul.f32 %v262, %v366
        %v375 = vmul.f32 %v263, %v367
        %v376 = vmul.f32 %v264, %v368
        %v377 = vmul.f32 %v265, %v369
        %v378 = vlaneseq
        %v379 = vshrl.u32 %v378, 7
        %v380 = vsub.s32 0, %v379
        %v381 = vrot.slane %v192, %v380
        %v382 = vmul.f32 %v370, %v381
        %v383 = vmul.f32 %v371, %v381
        %v384 = vmul.f32 %v372, %v381
        %v385 = vmul.f32 %v373, %v381
        %v386 = vmul.f32 %v374, %v381
        %v387 = vmul.f32 %v375, %v381
        %v388 = vmul.f32 %v376, %v381
        %v389 = vmul.f32 %v377, %v381
        %v390 = vlaneseq
        %v391 = vshrl.u32 %v390, 7
        %v392 = vsub.s32 2, %v391
        %v393 = vrot.slane %v192, %v392
        %v394 = vadd.f32 %v382, %v393
        %v395 = vadd.f32 %v383, %v393
        %v396 = vadd.f32 %v384, %v393
        %v397 = vadd.f32 %v385, %v393
        %v398 = vadd.f32 %v386, %v393
        %v399 = vadd.f32 %v387, %v393
        %v400 = vadd.f32 %v388, %v393
        %v401 = vadd.f32 %v389, %v393
        %v402 = vmul.f32 %v266, %v362
        %v403 = vmul.f32 %v267, %v363
        %v404 = vmul.f32 %v268, %v364
        %v405 = vmul.f32 %v269, %v365
        %v406 = vmul.f32 %v270, %v366
        %v407 = vmul.f32 %v271, %v367
        %v408 = vmul.f32 %v272, %v368
        %v409 = vmul.f32 %v273, %v369
        %v410 = vlaneseq
        %v411 = vshrl.u32 %v410, 7
        %v412 = vsub.s32 1, %v411
        %v413 = vrot.slane %v192, %v412
        %v414 = vmul.f32 %v402, %v413
        %v415 = vmul.f32 %v403, %v413
        %v416 = vmul.f32 %v404, %v413
        %v417 = vmul.f32 %v405, %v413
        %v418 = vmul.f32 %v406, %v413
        %v419 = vmul.f32 %v407, %v413
        %v420 = vmul.f32 %v408, %v413
        %v421 = vmul.f32 %v409, %v413
        %v422 = vlaneseq
        %v423 = vshrl.u32 %v422, 7
        %v424 = vsub.s32 3, %v423
        %v425 = vrot.slane %v192, %v424
        %v426 = vadd.f32 %v414, %v425
        %v427 = vadd.f32 %v415, %v425
        %v428 = vadd.f32 %v416, %v425
        %v429 = vadd.f32 %v417, %v425
        %v430 = vadd.f32 %v418, %v425
        %v431 = vadd.f32 %v419, %v425
        %v432 = vadd.f32 %v420, %v425
        %v433 = vadd.f32 %v421, %v425
        %v434 = vld [vmem:[%s2] sm:$0xf]
        %v435 = vld [vmem:[%s2 + $0x4] sm:$0xf]
        %v436 = vld [vmem:[%s2 + $0x8] sm:$0xf]
        %v437 = vld [vmem:[%s2 + $0xc] sm:$0xf]
        %v438 = vld [vmem:[%s2 + $0x10] sm:$0xf]
        %v439 = vld [vmem:[%s2 + $0x14] sm:$0xf]
        %v440 = vld [vmem:[%s2 + $0x18] sm:$0xf]
        %v441 = vld [vmem:[%s2 + $0x1c] sm:$0xf]
        %v442 = vld [vmem:[%s2 + $0x20] sm:$0xf]
        %v443 = vld [vmem:[%s2 + $0x24] sm:$0xf]
        %v444 = vld [vmem:[%s2 + $0x28] sm:$0xf]
        %v445 = vld [vmem:[%s2 + $0x2c] sm:$0xf]
        %v446 = vld [vmem:[%s2 + $0x30] sm:$0xf]
        %v447 = vld [vmem:[%s2 + $0x34] sm:$0xf]
        %v448 = vld [vmem:[%s2 + $0x38] sm:$0xf]
        %v449 = vld [vmem:[%s2 + $0x3c] sm:$0xf]
        %v450 = vpack.c.bf16 %v395, %v394
        %v451 = vpack.c.bf16 %v397, %v396
        %v452 = vpack.c.bf16 %v399, %v398
        %v453 = vpack.c.bf16 %v401, %v400
        %v454 = vpack.c.bf16 %v427, %v426
        %v455 = vpack.c.bf16 %v429, %v428
        %v456 = vpack.c.bf16 %v431, %v430
        %v457 = vpack.c.bf16 %v433, %v432
        %v466 = vunpack.c.l.b16 %v442
        %v467 = vunpack.c.l.b16 %v443
        %v468 = vunpack.c.l.b16 %v444
        %v469 = vunpack.c.l.b16 %v445
        %v470 = vunpack.c.l.b16 %v446
        %v471 = vunpack.c.l.b16 %v447
        %v472 = vunpack.c.l.b16 %v448
        %v473 = vunpack.c.l.b16 %v449
        %v474 = vpack.c.b16 %v467, %v466
        %v475 = vpack.c.b16 %v469, %v468
        %v476 = vpack.c.b16 %v471, %v470
        %v477 = vpack.c.b16 %v473, %v472
        %v483 = vsel %vm193, %v454, 0
        %v486 = vsel %vm193, %v455, 0
        %v489 = vsel %vm193, %v456, 0
        %v492 = vsel %vm193, %v457, 0
        %494 = vmatprep.subr.bf16.mxu0 0
        %495 = vmatpush1.bf16.msra.mxu0 %v474
        %496 = vmatprep.subr.bf16.mxu0 0
        %497 = vmatpush1.bf16.msra.mxu0 %v475
        %498 = vmatprep.subr.bf16.mxu0 0
        %499 = vmatpush1.bf16.msra.mxu0 %v476
        %500 = vmatprep.subr.bf16.mxu0 0
        %501 = vmatpush1.bf16.msra.mxu0 %v477
        %502 = vmatprep.subr.bf16.mxu0 0
        %503 = vmatpush1.bf16.msra.mxu0 0
        %504 = vmatprep.subr.bf16.mxu0 0
        %505 = vmatpush1.bf16.msra.mxu0 0
        %506 = vmatprep.subr.bf16.mxu0 0
        %507 = vmatpush1.bf16.msra.mxu0 0
        %508 = vmatprep.subr.bf16.mxu0 0
        %509 = vmatpush1.bf16.msra.mxu0 0
        %510 = vmatprep.subr.bf16.mxu0 0
        %511 = vmatpush1.bf16.msra.mxu0 0
        %512 = vmatprep.subr.bf16.mxu0 0
        %513 = vmatpush1.bf16.msra.mxu0 0
        %514 = vmatprep.subr.bf16.mxu0 0
        %515 = vmatpush1.bf16.msra.mxu0 0
        %516 = vmatprep.subr.bf16.mxu0 0
        %517 = vmatpush1.bf16.msra.mxu0 0
        %518 = vmatprep.subr.bf16.mxu0 0
        %519 = vmatpush1.bf16.msra.mxu0 0
        %520 = vmatprep.subr.bf16.mxu0 0
        %521 = vmatpush1.bf16.msra.mxu0 0
        %522 = vmatprep.subr.bf16.mxu0 0
        %523 = vmatpush1.bf16.msra.mxu0 0
        %524 = vmatprep.subr.bf16.mxu0 0
        %525 = vmatpush1.bf16.msra.mxu0 0
        %526 = vmatprep.mubr.bf16.mxu0 0
        %527 = vmatmul.mubr.bf16.gmra.mrb[0].mxu0 %v483
        %v528 = vpop.f32.mrb[0].mxu0
        %v529 = vadd.f32 0.0, %v528
        %v530 = vpop.f32.mrb[0].mxu0
        %v531 = vpop.f32.mrb[0].mxu0
        %v532 = vadd.f32 0.0, %v531
        %v533 = vpop.f32.mrb[0].mxu0
        %534 = vmatprep.mubr.bf16.mxu0 0
        %535 = vmatmul.mubr.bf16.gmra.mrb[0].mxu0 %v486
        %v536 = vpop.f32.mrb[0].mxu0
        %v537 = vadd.f32 0.0, %v536
        %v538 = vpop.f32.mrb[0].mxu0
        %v539 = vpop.f32.mrb[0].mxu0
        %v540 = vadd.f32 0.0, %v539
        %v541 = vpop.f32.mrb[0].mxu0
        %542 = vmatprep.mubr.bf16.mxu0 0
        %543 = vmatmul.mubr.bf16.gmra.mrb[0].mxu0 %v489
        %v544 = vpop.f32.mrb[0].mxu0
        %v545 = vadd.f32 0.0, %v544
        %v546 = vpop.f32.mrb[0].mxu0
        %v547 = vpop.f32.mrb[0].mxu0
        %v548 = vadd.f32 0.0, %v547
        %v549 = vpop.f32.mrb[0].mxu0
        %550 = vmatprep.mubr.bf16.mxu0 0
        %551 = vmatmul.mubr.bf16.gmra.mrb[0].mxu0 %v492
        %v552 = vpop.f32.mrb[0].mxu0
        %v553 = vadd.f32 0.0, %v552
        %v554 = vpop.f32.mrb[0].mxu0
        %v555 = vpop.f32.mrb[0].mxu0
        %v556 = vadd.f32 0.0, %v555
        %v557 = vpop.f32.mrb[0].mxu0
        %558 = vdwg.mxu0
        %v567 = vunpack.c.l.b16 %v434
        %v568 = vunpack.c.l.b16 %v435
        %v569 = vunpack.c.l.b16 %v436
        %v570 = vunpack.c.l.b16 %v437
        %v571 = vunpack.c.l.b16 %v438
        %v572 = vunpack.c.l.b16 %v439
        %v573 = vunpack.c.l.b16 %v440
        %v574 = vunpack.c.l.b16 %v441
        %v575 = vpack.c.b16 %v568, %v567
        %v576 = vpack.c.b16 %v570, %v569
        %v577 = vpack.c.b16 %v572, %v571
        %v578 = vpack.c.b16 %v574, %v573
        %v584 = vsel %vm193, %v450, 0
        %v587 = vsel %vm193, %v451, 0
        %v590 = vsel %vm193, %v452, 0
        %v593 = vsel %vm193, %v453, 0
        %595 = vmatprep.subr.bf16.mxu0 0
        %596 = vmatpush1.bf16.msra.mxu0 %v575
        %597 = vmatprep.subr.bf16.mxu0 0
        %598 = vmatpush1.bf16.msra.mxu0 %v576
        %599 = vmatprep.subr.bf16.mxu0 0
        %600 = vmatpush1.bf16.msra.mxu0 %v577
        %601 = vmatprep.subr.bf16.mxu0 0
        %602 = vmatpush1.bf16.msra.mxu0 %v578
        %603 = vmatprep.subr.bf16.mxu0 0
        %604 = vmatpush1.bf16.msra.mxu0 0
        %605 = vmatprep.subr.bf16.mxu0 0
        %606 = vmatpush1.bf16.msra.mxu0 0
        %607 = vmatprep.subr.bf16.mxu0 0
        %608 = vmatpush1.bf16.msra.mxu0 0
        %609 = vmatprep.subr.bf16.mxu0 0
        %610 = vmatpush1.bf16.msra.mxu0 0
        %611 = vmatprep.subr.bf16.mxu0 0
        %612 = vmatpush1.bf16.msra.mxu0 0
        %613 = vmatprep.subr.bf16.mxu0 0
        %614 = vmatpush1.bf16.msra.mxu0 0
        %615 = vmatprep.subr.bf16.mxu0 0
        %616 = vmatpush1.bf16.msra.mxu0 0
        %617 = vmatprep.subr.bf16.mxu0 0
        %618 = vmatpush1.bf16.msra.mxu0 0
        %619 = vmatprep.subr.bf16.mxu0 0
        %620 = vmatpush1.bf16.msra.mxu0 0
        %621 = vmatprep.subr.bf16.mxu0 0
        %622 = vmatpush1.bf16.msra.mxu0 0
        %623 = vmatprep.subr.bf16.mxu0 0
        %624 = vmatpush1.bf16.msra.mxu0 0
        %625 = vmatprep.subr.bf16.mxu0 0
        %626 = vmatpush1.bf16.msra.mxu0 0
        %627 = vmatprep.mubr.bf16.mxu0 0
        %628 = vmatmul.mubr.bf16.gmra.mrb[0].mxu0 %v584
        %v629 = vpop.f32.mrb[0].mxu0
        %v630 = vadd.f32 %v529, %v629
        %v631 = vpop.f32.mrb[0].mxu0
        %v632 = vpop.f32.mrb[0].mxu0
        %v633 = vadd.f32 %v532, %v632
        %v634 = vpop.f32.mrb[0].mxu0
        %635 = vmatprep.mubr.bf16.mxu0 0
        %636 = vmatmul.mubr.bf16.gmra.mrb[0].mxu0 %v587
        %v637 = vpop.f32.mrb[0].mxu0
        %v638 = vadd.f32 %v537, %v637
        %v639 = vpop.f32.mrb[0].mxu0
        %v640 = vpop.f32.mrb[0].mxu0
        %v641 = vadd.f32 %v540, %v640
        %v642 = vpop.f32.mrb[0].mxu0
        %643 = vmatprep.mubr.bf16.mxu0 0
        %644 = vmatmul.mubr.bf16.gmra.mrb[0].mxu0 %v590
        %v645 = vpop.f32.mrb[0].mxu0
        %v646 = vadd.f32 %v545, %v645
        %v647 = vpop.f32.mrb[0].mxu0
        %v648 = vpop.f32.mrb[0].mxu0
        %v649 = vadd.f32 %v548, %v648
        %v650 = vpop.f32.mrb[0].mxu0
        %651 = vmatprep.mubr.bf16.mxu0 0
        %652 = vmatmul.mubr.bf16.gmra.mrb[0].mxu0 %v593
        %v653 = vpop.f32.mrb[0].mxu0
        %v654 = vadd.f32 %v553, %v653
        %v655 = vpop.f32.mrb[0].mxu0
        %v656 = vpop.f32.mrb[0].mxu0
        %v657 = vadd.f32 %v556, %v656
        %v658 = vpop.f32.mrb[0].mxu0
        %659 = vdwg.mxu0
        %660 = vst [vmem:[%s166] sm:$0xff] %v630
        %661 = vst [vmem:[%s166 + $0x8] sm:$0xff] %v633
        %662 = vst [vmem:[%s166 + $0x10] sm:$0xff] %v638
        %663 = vst [vmem:[%s166 + $0x18] sm:$0xff] %v641
        %664 = vst [vmem:[%s166 + $0x20] sm:$0xff] %v646
        %665 = vst [vmem:[%s166 + $0x28] sm:$0xff] %v649
        %666 = vst [vmem:[%s166 + $0x30] sm:$0xff] %v654
        %667 = vst [vmem:[%s166 + $0x38] sm:$0xff] %v657
        %s668 = sand.u32 %s93, 1
        %s669 = scalar_lea.sflag [#allocation3], %s668
        %s670 = sand.u32 %s93, 1
        %s671 = smul.addr %s670, 64
        %s672 = scalar_lea.vmem [#allocation2], %s671
        // Predicated region
        $region33: #{patch_merging.1} parent=31 // pred_check
          %p673 = pneg %p103
        $region34: #{patch_merging.1} parent=31 // pred_check_branch
          %675 = sbr.rel (%p673) target = $region36
        $region35: #{patch_merging.1} parent=31 // pred_region
          %s676 = smul.u32 8, %s17
          %s678 = ssub.s32 1024, 1024
          %679 = vsyncadd %s669, %s678
          %s680 = smul.addr %s676, 128
          %s681 = scalar_lea.hbm %s3, %s680
          %s682 = sshll.u32 %s672, 4
          %s683 = int_to_ptr.vmem [resolvable:$true] %s682
          %688 = dma.vmem_to_hbm [thread:$0]  %s683, 1024, %s681, %s669, 128, 128, 8
        $region36: #{patch_merging.1} parent=31 // pred_fallthru
          _
      $region32: #{patch_merging.1} parent=5 // pred_fallthru
        _
      %p689 = scmp.le.s32.totalorder 2, %s12
      // Predicated region
      $region37: #{patch_merging.1} parent=5 // pred_check
        %p690 = pneg %p689
      $region38: #{patch_merging.1} parent=5 // pred_check_branch
        %692 = sbr.rel (%p690) target = $region40
      $region39: #{patch_merging.1} parent=5 // pred_region
        %s693 = ssub.s32 %s12, 2
        // Predicated region
        $region41: #{patch_merging.1} parent=39 // pred_check
          %p694 = pneg %p109
        $region42: #{patch_merging.1} parent=39 // pred_check_branch
          %696 = sbr.rel (%p694) target = $region44
        $region43: #{patch_merging.1} parent=39 // pred_region
          %s697 = sand.u32 %s94, 1
          %s698 = scalar_lea.sflag [#allocation3], %s697
          %s699 = sand.u32 %s94, 1
          %s700 = smul.addr %s699, 64
          %s701 = scalar_lea.vmem [#allocation2], %s700
          %702 = dma.done %s698, 1024
        $region44: #{patch_merging.1} parent=39 // pred_fallthru
          _
      $region40: #{patch_merging.1} parent=5 // pred_fallthru
        _
    $region6: #{patch_merging.1} parent=1 // loop_footer
      %s16 = sadd.s32 1, %s12
    $region7: #{patch_merging.1} parent=1 // loop_footer_branch
      %11 = sbr.rel target = $region3
    $region8: #{patch_merging.1} parent=1 // loop_exit
      _
    %703 = vsyncpa [#allocation3], 1
    %s704 = scalar_lea.sflag [#allocation3], 1
    %705 = vsyncpa %s704, 1

</llo_original>
